<compile_context>
chip_gen: v5e
topology: v5e:2x2
jax: 0.10.0
libtpu: 0.0.40
codegen_flags: <defaults>
</compile_context>

<pallas_src>
import jax
import jax.numpy as jnp
from jax.experimental import pallas as pl
from jax.experimental.pallas import tpu as pltpu

EPS = 1e-5


# ----------------------------- hardware budgeting ---------------------------

def _vmem_budget_bytes():
    """Per-generation VMEM budget (~80% of physical capacity).

    v7x -> ~51 of 64 MiB, v5e/v6e -> ~102 of 128 MiB.  Leaves headroom for
    compiler-internal scratch so the limit never equals physical VMEM.
    """
    try:
        cap = pltpu.get_tpu_info().vmem_capacity_bytes
    except Exception:
        cap = 128 << 20
    return int(cap * 0.8)


def _num_tensorcores():
    """Best-effort TensorCore count (2 on v7x, 1 on v5e/v6e)."""
    try:
        info = pltpu.get_tpu_info()
        for attr in ("num_cores", "tensorcore_count", "num_tensorcores",
                     "core_count"):
            v = getattr(info, attr, None)
            if isinstance(v, int) and v > 0:
                return v
    except Exception:
        pass
    v = getattr(jax.devices()[0], "num_cores", None)
    return v if isinstance(v, int) and v > 0 else 1


def _buffered_spec(block_shape, index_map, bufs):
    """BlockSpec with a deeper DMA pipeline when this JAX exposes the API."""
    try:
        return pl.BlockSpec(block_shape, index_map,
                            pipeline_mode=pl.Buffered(bufs))
    except Exception:  # pipeline_mode / pl.Buffered unavailable -> default 2-deep
        return pl.BlockSpec(block_shape, index_map)


# ----------------------------- kernel bodies --------------------------------

def _bn_train(y, gamma, beta):
    """BatchNorm1d training mode, two-pass (numerically safe) stats in f32."""
    mean = jnp.mean(y, axis=0, keepdims=True)
    var = jnp.mean((y - mean) * (y - mean), axis=0, keepdims=True)  # biased
    inv = jax.lax.rsqrt(var + EPS)
    return (y - mean) * (gamma * inv) + beta


def _backbone_stream_kernel(x_ref, wb_ref, bb_ref, feats_ref, acc_ref):
    """K-streamed backbone Linear.  grid = (n_split over N, nk over K)."""
    k = pl.program_id(1)

    @pl.when(k == 0)
    def _init():
        acc_ref[...] = jnp.zeros_like(acc_ref)

    x_bf = x_ref[...].astype(jnp.bfloat16)            # in-kernel cast (no wrapper pass)
    acc_ref[...] += jnp.dot(x_bf, wb_ref[...],
                            preferred_element_type=jnp.float32)

    @pl.when(k == pl.num_programs(1) - 1)
    def _finalize():
        feats = jnp.maximum(acc_ref[...] + bb_ref[...], 0.0)
        feats_ref[...] = feats.astype(feats_ref.dtype)


def _backbone_simple_kernel(x_ref, wb_ref, bb_ref, feats_ref):
    """Fast path: whole K reduction fits in VMEM; no accumulator machinery."""
    x_bf = x_ref[...].astype(jnp.bfloat16)
    y = jnp.dot(x_bf, wb_ref[...], preferred_element_type=jnp.float32)
    feats_ref[...] = jnp.maximum(y + bb_ref[...], 0.0).astype(feats_ref.dtype)


def _head_kernel(feats_ref,
                 w1_ref, p1_ref,
                 w3_ref, p3_ref,
                 wp1_ref, pp1_ref,
                 wp2_ref, bp2_ref,
                 h_ref, z_ref):
    """Projector (layer1 + layer3) and predictor (layer1 + layer2).

    BN statistics are over the full batch (feats_ref holds all B rows).
    """
    feats = feats_ref[...]                            # (B, n_features) bf16

    # ---- projector layer1: Linear + BN + ReLU ------------------------------
    p1 = p1_ref[...]
    y1 = jnp.dot(feats, w1_ref[...], preferred_element_type=jnp.float32)
    y1 = _bn_train(y1 + p1[0:1, :], p1[1:2, :], p1[2:3, :])
    y1 = jnp.maximum(y1, 0.0).astype(jnp.bfloat16)

    # ---- projector layer3: Linear + BN (NO ReLU); layer2 is skipped --------
    # (the reference projection_MLP.forward calls layer1 then layer3)
    p3 = p3_ref[...]
    y3 = jnp.dot(y1, w3_ref[...], preferred_element_type=jnp.float32)
    h = _bn_train(y3 + p3[0:1, :], p3[1:2, :], p3[2:3, :])
    h_ref[...] = h.astype(h_ref.dtype)

    # ---- predictor layer1: Linear + BN + ReLU -------------------------------
    pp1 = pp1_ref[...]
    q1 = jnp.dot(h.astype(jnp.bfloat16), wp1_ref[...],
                 preferred_element_type=jnp.float32)
    q1 = _bn_train(q1 + pp1[0:1, :], pp1[1:2, :], pp1[2:3, :])
    q1 = jnp.maximum(q1, 0.0).astype(jnp.bfloat16)

    # ---- predictor layer2: Linear (no BN, no ReLU) ---------------------------
    z = jnp.dot(q1, wp2_ref[...], preferred_element_type=jnp.float32)
    z_ref[...] = (z + bp2_ref[...]).astype(z_ref.dtype)


# ----------------------------- wrappers --------------------------------------

def _backbone_forward(x_flat, wb, bb, *, vmem_limit, force_stream_tk=None):
    """relu(x_flat @ wb + bb) -> (B, n_features) bf16."""
    B, in_flat = x_flat.shape
    n_features = wb.shape[1]

    # Split the N (feature) columns across TensorCores (v7x has 2; v5e/v6e 1).
    n_tc = _num_tensorcores()
    n_split = n_tc if (n_tc > 1 and n_features % (128 * n_tc) == 0) else 1
    tn = n_features // n_split

    wb_bufs = 3   # deepened wb stream: loop is pure back-to-back DMA at B=8
    # Per-unit-of-tk VMEM cost: wb in-flight buffers (bf16) + double-buffered x (f32).
    per_tk = wb_bufs * tn * 2 + 2 * B * 4
    # Fixed cost: acc scratch + feats out buffers + bb + slack for internals.
    fixed = B * tn * 4 + 2 * B * tn * 2 + 2 * tn * 4 + (2 << 20)

    # ---- fast path: whole reduction fits -> no reduction grid at all ----
    full_cost = in_flat * (2 * tn * 2 + 2 * B * 4) + fixed
    use_fast = force_stream_tk is None and (full_cost <= vmem_limit
                                            or in_flat % 128 != 0)
    if use_fast:
        return pl.pallas_call(
            _backbone_simple_kernel,
            grid=(n_split,),
            in_specs=[
                pl.BlockSpec((B, in_flat), lambda j: (0, 0)),
                pl.BlockSpec((in_flat, tn), lambda j: (0, j)),
                pl.BlockSpec((1, tn), lambda j: (0, j)),
            ],
            out_specs=pl.BlockSpec((B, tn), lambda j: (0, j)),
            out_shape=jax.ShapeDtypeStruct((B, n_features), jnp.bfloat16),
            compiler_params=pltpu.CompilerParams(
                dimension_semantics=("parallel",),
                vmem_limit_bytes=vmem_limit,
            ),
        )(x_flat, wb, bb)

    # ---- streamed path: pick the largest K tile that fits the VMEM budget ----
    if force_stream_tk is not None:
        tk = force_stream_tk
        assert tk % 128 == 0 and in_flat % tk == 0
    else:
        budget = max(vmem_limit - fixed, 128 * per_tk)
        tk_cap = min((budget // per_tk) // 128 * 128, 8192, in_flat)
        tk = None
        t = 128
        while t <= tk_cap:
            if in_flat % t == 0:
                tk = t
            t += 128
        if tk is None:            # no multiple-of-128 divisor found
            tk = in_flat
    nk = in_flat // tk

    return pl.pallas_call(
        _backbone_stream_kernel,
        grid=(n_split, nk),
        in_specs=[
            pl.BlockSpec((B, tk), lambda j, k: (0, k)),           # x: f32 K stream
            _buffered_spec((tk, tn), lambda j, k: (k, j), wb_bufs),  # wb: deep K stream
            pl.BlockSpec((1, tn), lambda j, k: (0, j)),            # bb
        ],
        out_specs=pl.BlockSpec((B, tn), lambda j, k: (0, j)),
        out_shape=jax.ShapeDtypeStruct((B, n_features), jnp.bfloat16),
        scratch_shapes=[pltpu.VMEM((B, tn), jnp.float32)],
        compiler_params=pltpu.CompilerParams(
            dimension_semantics=("parallel", "arbitrary"),
            vmem_limit_bytes=vmem_limit,
        ),
    )(x_flat, wb, bb)


def _head_forward(feats, params, *, vmem_limit):
    """Projector + predictor on the full-batch features (gridless call)."""
    B = feats.shape[0]
    proj_out = params["w3"].shape[1]
    pred_out = params["wp2"].shape[1]
    return pl.pallas_call(
        _head_kernel,
        out_shape=(
            jax.ShapeDtypeStruct((B, proj_out), jnp.float32),
            jax.ShapeDtypeStruct((B, pred_out), jnp.float32),
        ),
        compiler_params=pltpu.CompilerParams(vmem_limit_bytes=vmem_limit),
    )(feats,
      params["w1"], params["p1"],
      params["w3"], params["p3"],
      params["wp1"], params["pp1"],
      params["wp2"], params["bp2"])


def simsiam_bn_forward(x_flat, params, *, force_stream_tk=None):
    """x_flat: (B, C*H*W) float32.  Returns (h, z) float32, like the module."""
    vmem_limit = _vmem_budget_bytes()
    feats = _backbone_forward(x_flat, params["wb"], params["bb"],
                              vmem_limit=vmem_limit,
                              force_stream_tk=force_stream_tk)
    return _head_forward(feats, params, vmem_limit=vmem_limit)


# ----------------------------- params & reference ----------------------------

def init_params(key, in_flat, n_features, proj_hidden, proj_out,
                pred_hidden, pred_out):
    ks = jax.random.split(key, 16)

    def lin_w(k, d_in, d_out):
        w = jax.random.normal(k, (d_in, d_out), jnp.float32) / jnp.sqrt(d_in)
        return w.astype(jnp.bfloat16)

    def vec(k, d, scale=0.1):
        return scale * jax.random.normal(k, (1, d), jnp.float32)

    def bn_pack(kb, kg, ke, d):
        # rows: [linear bias, bn gamma, bn beta]
        bias = vec(kb, d)
        gamma = 1.0 + vec(kg, d)
        beta = vec(ke, d)
        return jnp.concatenate([bias, gamma, beta], axis=0)

    return dict(
        wb=lin_w(ks[0], in_flat, n_features),
        bb=vec(ks[1], n_features),
        w1=lin_w(ks[2], n_features, proj_hidden),
        p1=bn_pack(ks[3], ks[4], ks[5], proj_hidden),
        w3=lin_w(ks[6], proj_hidden, proj_out),
        p3=bn_pack(ks[7], ks[8], ks[9], proj_out),
        wp1=lin_w(ks[10], proj_out, pred_hidden),
        pp1=bn_pack(ks[11], ks[12], ks[13], pred_hidden),
        wp2=lin_w(ks[14], pred_hidden, pred_out),
        bp2=vec(ks[15], pred_out),
    )


def reference_forward(x_flat, params):
    """Pure-JAX reference with the same bf16/f32 mixed precision."""
    def dot(a, w):
        return jnp.dot(a.astype(jnp.bfloat16), w,
                       preferred_element_type=jnp.float32)

    def bn(y, packed):
        b, g, be = packed[0:1], packed[1:2], packed[2:3]
        y = y + b
        mean = jnp.mean(y, axis=0, keepdims=True)
        var = jnp.mean((y - mean) ** 2, axis=0, keepdims=True)
        return g * (y - mean) * jax.lax.rsqrt(var + EPS) + be

    feats = jnp.maximum(dot(x_flat, params["wb"]) + params["bb"], 0.0)
    feats = feats.astype(jnp.bfloat16)                 # phase-1/phase-2 boundary
    y1 = jnp.maximum(bn(dot(feats, params["w1"]), params["p1"]), 0.0)
    h = bn(dot(y1, params["w3"]), params["p3"])
    q1 = jnp.maximum(bn(dot(h, params["wp1"]), params["pp1"]), 0.0)
    z = dot(q1, params["wp2"]) + params["bp2"]
    return h, z


# ----------------------------- demo / self-test ------------------------------

if __name__ == "__main__":
    # small shapes: batch=8, channels=4, spatial=16x16
    B, C, H, W = 8, 4, 16, 16
    n_features = 256      # backbone feature dim (resnet.fc.in_features stand-in)
    proj_hidden = 256     # projection_MLP hidden (=2048 in full model)
    proj_out = 256        # projection_MLP out    (=2048 in full model)
    pred_hidden = 128     # prediction_MLP hidden (=512 in full model)
    pred_out = 256        # prediction_MLP out    (=2048 in full model)

    key = jax.random.PRNGKey(0)
    kx, kp = jax.random.split(key)
    x = jax.random.normal(kx, (B, C, H, W), jnp.float32)   # NCHW, like PyTorch
    x_flat = x.reshape(B, C * H * W)                        # glue: flatten

    params = init_params(kp, C * H * W, n_features, proj_hidden, proj_out,
                         pred_hidden, pred_out)

    h_exp, z_exp = reference_forward(x_flat, params)

    # Path 1: auto-configured (fast VMEM-resident path at these small shapes;
    # the N-split across TensorCores engages automatically on multi-core parts).
    h, z = simsiam_bn_forward(x_flat, params)
    jax.block_until_ready((h, z))
    assert h.shape == (B, proj_out) and z.shape == (B, pred_out)
    assert jnp.all(jnp.isfinite(h)) and jnp.all(jnp.isfinite(z))
    assert jnp.allclose(h, h_exp, atol=2e-2, rtol=2e-2)
    assert jnp.allclose(z, z_exp, atol=2e-2, rtol=2e-2)

    # Path 2: force the K-streamed accumulator path (what real backbone sizes
    # use), to validate the reduction-grid machinery end to end.
    h2, z2 = simsiam_bn_forward(x_flat, params, force_stream_tk=256)
    jax.block_until_ready((h2, z2))
    assert jnp.allclose(h2, h_exp, atol=2e-2, rtol=2e-2)
    assert jnp.allclose(z2, z_exp, atol=2e-2, rtol=2e-2)

    print("KERNEL_OK")
</pallas_src>

<mosaic_0001>
module attributes {stable_mosaic.version = 11 : i64} {
  func.func @_backbone_simple_kernel(%arg0: i32, %arg1: memref<8x1024xf32, #tpu.memory_space<vmem>>, %arg2: memref<1024x256xbf16, #tpu.memory_space<vmem>>, %arg3: memref<1x256xf32, #tpu.memory_space<vmem>>, %arg4: memref<8x256xbf16, #tpu.memory_space<vmem>>) attributes {dimension_semantics = [#tpu.dimension_semantics<parallel>], iteration_bounds = array<i64: 1>, scalar_prefetch = 0 : i64, scratch_operands = 0 : i64, tpu.core_type = #tpu.core_type<tc>, window_params = [{pipeline_mode = #tpu.pipeline_mode<synchronous>, transform_indices = @transform_0, window_bounds = array<i64: 8, 1024>}, {transform_indices = @transform_1, window_bounds = array<i64: 1024, 256>}, {transform_indices = @transform_2, window_bounds = array<i64: 1, 256>}, {transform_indices = @transform_3, window_bounds = array<i64: 8, 256>}]} {
    %c0 = arith.constant 0 : index
    %c0_0 = arith.constant 0 : index
    %0 = vector.load %arg1[%c0, %c0_0] : memref<8x1024xf32, #tpu.memory_space<vmem>>, vector<8x1024xf32>
    %1 = arith.truncf %0 : vector<8x1024xf32> to vector<8x1024xbf16>
    %c0_1 = arith.constant 0 : index
    %c0_2 = arith.constant 0 : index
    %2 = vector.load %arg2[%c0_1, %c0_2] : memref<1024x256xbf16, #tpu.memory_space<vmem>>, vector<1024x256xbf16>
    %cst = arith.constant dense<0.000000e+00> : vector<8x256xf32>
    %3 = tpu.matmul %1, %2, %cst {dimension_numbers = #tpu.dot_dimension_numbers<[1], [0], [0], [1], [0, 0, 1, 1], [], []>} : vector<8x1024xbf16>, vector<1024x256xbf16>, vector<8x256xf32> -> vector<8x256xf32>
    %c0_3 = arith.constant 0 : index
    %c0_4 = arith.constant 0 : index
    %4 = vector.load %arg3[%c0_3, %c0_4] : memref<1x256xf32, #tpu.memory_space<vmem>>, vector<1x256xf32>
    %5 = vector.broadcast %4 : vector<1x256xf32> to vector<8x256xf32>
    %6 = arith.addf %3, %5 : vector<8x256xf32>
    %cst_5 = arith.constant 0.000000e+00 : f32
    %7 = vector.broadcast %cst_5 : f32 to vector<8x256xf32>
    %8 = arith.maximumf %6, %7 : vector<8x256xf32>
    %9 = arith.truncf %8 : vector<8x256xf32> to vector<8x256xbf16>
    %c0_6 = arith.constant 0 : index
    %c0_7 = arith.constant 0 : index
    %10 = vector.load %arg4[%c0_6, %c0_7] : memref<8x256xbf16, #tpu.memory_space<vmem>>, vector<8x256xbf16>
    tpu.vector_store %arg4[%c0_6, %c0_7], %9 {strides = array<i32>} : memref<8x256xbf16, #tpu.memory_space<vmem>>, vector<8x256xbf16>,
    return
  }
  func.func @transform_0(%arg0: i32) -> (i32, i32) {
    %c0_i32 = arith.constant 0 : i32
    %c0_i32_0 = arith.constant 0 : i32
    %c0_i32_1 = arith.constant 0 : i32
    return %c0_i32, %c0_i32_0 : i32, i32
  }
  func.func @transform_1(%arg0: i32) -> (i32, i32) {
    %c0_i32 = arith.constant 0 : i32
    %c0_i32_0 = arith.constant 0 : i32
    return %c0_i32, %arg0 : i32, i32
  }
  func.func @transform_2(%arg0: i32) -> (i32, i32) {
    %c0_i32 = arith.constant 0 : i32
    %c0_i32_0 = arith.constant 0 : i32
    return %c0_i32, %arg0 : i32, i32
  }
  func.func @transform_3(%arg0: i32) -> (i32, i32) {
    %c0_i32 = arith.constant 0 : i32
    %c0_i32_0 = arith.constant 0 : i32
    return %c0_i32, %arg0 : i32, i32
  }
}

</mosaic_0001>

<llo_original>
// kernel: tpu_custom_call.1
$region0: #{tpu_custom_call.1}
  #allocation0 [shape = 'u32[]', space=smem, size = 0x4, offset = 0x4, fixed_abs, tag = 'smem constant byte address 0x4 - core index']
  #allocation1 [shape = 'u32[72,128]{1,0:T(1,128)}', space=vmem, size = 0x9000, scoped, tag = 'internal scratch']
  %s0 = inlined_call_operand.hbm [shape: f32[8,1024], index: 0, kind: input, shape index: {}]
  %s1 = inlined_call_operand.hbm [shape: bf16[1024,256], index: 1, kind: input, shape index: {}]
  %s2 = inlined_call_operand.hbm [shape: f32[1,256], index: 2, kind: input, shape index: {}]
  %s3 = inlined_call_operand.hbm [shape: bf16[8,256], index: 3, kind: output, shape index: {}]
  %s4 = sld [smem:[#allocation0]]
  $region34: #{tpu_custom_call.1} parent=0
    _
  %s6 = ssub.s32 1, %s4
  %s7 = scalar_select 0, %s6, %s4
  $region1: #{tpu_custom_call.1} parent=0
    #allocation2 [shape = 'u8[32768]{0}', space=vmem, size = 0x8000, scoped, tag = 'input window, operand 0, single buffered']
    #allocation3 [shape = 's32[1]{0}', space=sflag, size = 0x4, scoped, tag = 'scoped memory for tpu_custom_call.1']
    #allocation4 [shape = 's32[1]{0}', space=sflag, size = 0x4, scoped, tag = 'scoped memory for tpu_custom_call.1']
    #allocation5 [shape = 'u8[524288]{0}', space=vmem, size = 0x80000, scoped, tag = 'input window, operand 1, single buffered']
    #allocation6 [shape = 's32[1]{0}', space=sflag, size = 0x4, scoped, tag = 'scoped memory for tpu_custom_call.1']
    #allocation7 [shape = 'u8[1024]{0}', space=vmem, size = 0x400, scoped, tag = 'input window, operand 2, single buffered']
    #allocation8 [shape = 'u8[4096]{0}', space=vmem, size = 0x1000, scoped, tag = 'output window, operand 0, single buffered']
    %8 = vsyncpa [#allocation3], 0
    %9 = vsyncpa [#allocation6], 0
    %10 = vsyncpa [#allocation4], 0
    // Predicated region
    $region2: #{tpu_custom_call.1} parent=1 // pred_check
      _
    $region3: #{tpu_custom_call.1} parent=1 // pred_check_branch
      %12 = sbr.rel (0) target = $region5
    $region4: #{tpu_custom_call.1} parent=1 // pred_region
      %14 = vsyncadd [#allocation3], 0
      %s16 = sshll.u32 %s0, 4
      %s17 = int_to_ptr.hbm [resolvable:$true] %s16
      %s18 = sshll.u32 [#allocation2], 4
      %s19 = int_to_ptr.vmem [resolvable:$true] %s18
      %21 = dma.hbm_to_vmem [thread:$0]  %s17, 1024, %s19, [#allocation3]
    $region5: #{tpu_custom_call.1} parent=1 // pred_fallthru
      _
    // Predicated region
    $region6: #{tpu_custom_call.1} parent=1 // pred_check
      _
    $region7: #{tpu_custom_call.1} parent=1 // pred_check_branch
      %23 = sbr.rel (0) target = $region9
    $region8: #{tpu_custom_call.1} parent=1 // pred_region
      %25 = vsyncadd [#allocation6], 0
      %s26 = sshll.u32 %s1, 4
      %s27 = int_to_ptr.hbm [resolvable:$true] %s26
      %s28 = sshll.u32 [#allocation5], 4
      %s29 = int_to_ptr.vmem [resolvable:$true] %s28
      %34 = dma.hbm_to_vmem [thread:$0]  %s27, 16384, %s29, [#allocation6], 128, 128, 8
    $region9: #{tpu_custom_call.1} parent=1 // pred_fallthru
      _
    // Predicated region
    $region10: #{tpu_custom_call.1} parent=1 // pred_check
      _
    $region11: #{tpu_custom_call.1} parent=1 // pred_check_branch
      %36 = sbr.rel (0) target = $region13
    $region12: #{tpu_custom_call.1} parent=1 // pred_region
      %38 = vsyncadd [#allocation6], 0
      %s40 = sshll.u32 %s2, 4
      %s41 = int_to_ptr.hbm [resolvable:$true] %s40
      %s42 = sshll.u32 [#allocation7], 4
      %s43 = int_to_ptr.vmem [resolvable:$true] %s42
      %45 = dma.hbm_to_vmem [thread:$0]  %s41, 32, %s43, [#allocation6]
    $region13: #{tpu_custom_call.1} parent=1 // pred_fallthru
      _
    // Predicated region
    $region14: #{tpu_custom_call.1} parent=1 // pred_check
      _
    $region15: #{tpu_custom_call.1} parent=1 // pred_check_branch
      %47 = sbr.rel (0) target = $region17
    $region16: #{tpu_custom_call.1} parent=1 // pred_region
      %49 = dma.done [#allocation3], 1024
    $region17: #{tpu_custom_call.1} parent=1 // pred_fallthru
      _
    // Predicated region
    $region18: #{tpu_custom_call.1} parent=1 // pred_check
      _
    $region19: #{tpu_custom_call.1} parent=1 // pred_check_branch
      %51 = sbr.rel (0) target = $region21
    $region20: #{tpu_custom_call.1} parent=1 // pred_region
      %53 = dma.done [#allocation6], 16384
    $region21: #{tpu_custom_call.1} parent=1 // pred_fallthru
      _
    // Predicated region
    $region22: #{tpu_custom_call.1} parent=1 // pred_check
      _
    $region23: #{tpu_custom_call.1} parent=1 // pred_check_branch
      %55 = sbr.rel (0) target = $region25
    $region24: #{tpu_custom_call.1} parent=1 // pred_region
      %57 = dma.done [#allocation6], 32
    $region25: #{tpu_custom_call.1} parent=1 // pred_fallthru
      _
    %v58 = vld [vmem:[#allocation2] sm:$0xff]
    %v59 = vld [vmem:[#allocation2 + $0x8] sm:$0xff]
    %v60 = vld [vmem:[#allocation2 + $0x10] sm:$0xff]
    %v61 = vld [vmem:[#allocation2 + $0x18] sm:$0xff]
    %v62 = vld [vmem:[#allocation2 + $0x20] sm:$0xff]
    %v63 = vld [vmem:[#allocation2 + $0x28] sm:$0xff]
    %v64 = vld [vmem:[#allocation2 + $0x30] sm:$0xff]
    %v65 = vld [vmem:[#allocation2 + $0x38] sm:$0xff]
    %v66 = vpack.c.bf16 %v58, %v58
    %v67 = vpack.c.bf16 %v59, %v59
    %v68 = vpack.c.bf16 %v60, %v60
    %v69 = vpack.c.bf16 %v61, %v61
    %v70 = vpack.c.bf16 %v62, %v62
    %v71 = vpack.c.bf16 %v63, %v63
    %v72 = vpack.c.bf16 %v64, %v64
    %v73 = vpack.c.bf16 %v65, %v65
    %v74 = vld [vmem:[#allocation5] sm:$0xff]
    %v75 = vld [vmem:[#allocation5 + $0x8] sm:$0xff]
    %v76 = vld [vmem:[#allocation5 + $0x10] sm:$0xff]
    %v77 = vld [vmem:[#allocation5 + $0x18] sm:$0xff]
    %v78 = vld [vmem:[#allocation5 + $0x20] sm:$0xff]
    %v79 = vld [vmem:[#allocation5 + $0x28] sm:$0xff]
    %v80 = vld [vmem:[#allocation5 + $0x30] sm:$0xff]
    %v81 = vld [vmem:[#allocation5 + $0x38] sm:$0xff]
    %v82 = vld [vmem:[#allocation5 + $0x40] sm:$0xff]
    %v83 = vld [vmem:[#allocation5 + $0x48] sm:$0xff]
    %v84 = vld [vmem:[#allocation5 + $0x50] sm:$0xff]
    %v85 = vld [vmem:[#allocation5 + $0x58] sm:$0xff]
    %v86 = vld [vmem:[#allocation5 + $0x60] sm:$0xff]
    %v87 = vld [vmem:[#allocation5 + $0x68] sm:$0xff]
    %v88 = vld [vmem:[#allocation5 + $0x70] sm:$0xff]
    %v89 = vld [vmem:[#allocation5 + $0x78] sm:$0xff]
    %v90 = vld [vmem:[#allocation5 + $0x80] sm:$0xff]
    %v91 = vld [vmem:[#allocation5 + $0x88] sm:$0xff]
    %v92 = vld [vmem:[#allocation5 + $0x90] sm:$0xff]
    %v93 = vld [vmem:[#allocation5 + $0x98] sm:$0xff]
    %v94 = vld [vmem:[#allocation5 + $0xa0] sm:$0xff]
    %v95 = vld [vmem:[#allocation5 + $0xa8] sm:$0xff]
    %v96 = vld [vmem:[#allocation5 + $0xb0] sm:$0xff]
    %v97 = vld [vmem:[#allocation5 + $0xb8] sm:$0xff]
    %v98 = vld [vmem:[#allocation5 + $0xc0] sm:$0xff]
    %v99 = vld [vmem:[#allocation5 + $0xc8] sm:$0xff]
    %v100 = vld [vmem:[#allocation5 + $0xd0] sm:$0xff]
    %v101 = vld [vmem:[#allocation5 + $0xd8] sm:$0xff]
    %v102 = vld [vmem:[#allocation5 + $0xe0] sm:$0xff]
    %v103 = vld [vmem:[#allocation5 + $0xe8] sm:$0xff]
    %v104 = vld [vmem:[#allocation5 + $0xf0] sm:$0xff]
    %v105 = vld [vmem:[#allocation5 + $0xf8] sm:$0xff]
    %v106 = vld [vmem:[#allocation5 + $0x100] sm:$0xff]
    %v107 = vld [vmem:[#allocation5 + $0x108] sm:$0xff]
    %v108 = vld [vmem:[#allocation5 + $0x110] sm:$0xff]
    %v109 = vld [vmem:[#allocation5 + $0x118] sm:$0xff]
    %v110 = vld [vmem:[#allocation5 + $0x120] sm:$0xff]
    %v111 = vld [vmem:[#allocation5 + $0x128] sm:$0xff]
    %v112 = vld [vmem:[#allocation5 + $0x130] sm:$0xff]
    %v113 = vld [vmem:[#allocation5 + $0x138] sm:$0xff]
    %v114 = vld [vmem:[#allocation5 + $0x140] sm:$0xff]
    %v115 = vld [vmem:[#allocation5 + $0x148] sm:$0xff]
    %v116 = vld [vmem:[#allocation5 + $0x150] sm:$0xff]
    %v117 = vld [vmem:[#allocation5 + $0x158] sm:$0xff]
    %v118 = vld [vmem:[#allocation5 + $0x160] sm:$0xff]
    %v119 = vld [vmem:[#allocation5 + $0x168] sm:$0xff]
    %v120 = vld [vmem:[#allocation5 + $0x170] sm:$0xff]
    %v121 = vld [vmem:[#allocation5 + $0x178] sm:$0xff]
    %v122 = vld [vmem:[#allocation5 + $0x180] sm:$0xff]
    %v123 = vld [vmem:[#allocation5 + $0x188] sm:$0xff]
    %v124 = vld [vmem:[#allocation5 + $0x190] sm:$0xff]
    %v125 = vld [vmem:[#allocation5 + $0x198] sm:$0xff]
    %v126 = vld [vmem:[#allocation5 + $0x1a0] sm:$0xff]
    %v127 = vld [vmem:[#allocation5 + $0x1a8] sm:$0xff]
    %v128 = vld [vmem:[#allocation5 + $0x1b0] sm:$0xff]
    %v129 = vld [vmem:[#allocation5 + $0x1b8] sm:$0xff]
    %v130 = vld [vmem:[#allocation5 + $0x1c0] sm:$0xff]
    %v131 = vld [vmem:[#allocation5 + $0x1c8] sm:$0xff]
    %v132 = vld [vmem:[#allocation5 + $0x1d0] sm:$0xff]
    %v133 = vld [vmem:[#allocation5 + $0x1d8] sm:$0xff]
    %v134 = vld [vmem:[#allocation5 + $0x1e0] sm:$0xff]
    %v135 = vld [vmem:[#allocation5 + $0x1e8] sm:$0xff]
    %v136 = vld [vmem:[#allocation5 + $0x1f0] sm:$0xff]
    %v137 = vld [vmem:[#allocation5 + $0x1f8] sm:$0xff]
    %v138 = vld [vmem:[#allocation5 + $0x200] sm:$0xff]
    %v139 = vld [vmem:[#allocation5 + $0x208] sm:$0xff]
    %v140 = vld [vmem:[#allocation5 + $0x210] sm:$0xff]
    %v141 = vld [vmem:[#allocation5 + $0x218] sm:$0xff]
    %v142 = vld [vmem:[#allocation5 + $0x220] sm:$0xff]
    %v143 = vld [vmem:[#allocation5 + $0x228] sm:$0xff]
    %v144 = vld [vmem:[#allocation5 + $0x230] sm:$0xff]
    %v145 = vld [vmem:[#allocation5 + $0x238] sm:$0xff]
    %v146 = vld [vmem:[#allocation5 + $0x240] sm:$0xff]
    %v147 = vld [vmem:[#allocation5 + $0x248] sm:$0xff]
    %v148 = vld [vmem:[#allocation5 + $0x250] sm:$0xff]
    %v149 = vld [vmem:[#allocation5 + $0x258] sm:$0xff]
    %v150 = vld [vmem:[#allocation5 + $0x260] sm:$0xff]
    %v151 = vld [vmem:[#allocation5 + $0x268] sm:$0xff]
    %v152 = vld [vmem:[#allocation5 + $0x270] sm:$0xff]
    %v153 = vld [vmem:[#allocation5 + $0x278] sm:$0xff]
    %v154 = vld [vmem:[#allocation5 + $0x280] sm:$0xff]
    %v155 = vld [vmem:[#allocation5 + $0x288] sm:$0xff]
    %v156 = vld [vmem:[#allocation5 + $0x290] sm:$0xff]
    %v157 = vld [vmem:[#allocation5 + $0x298] sm:$0xff]
    %v158 = vld [vmem:[#allocation5 + $0x2a0] sm:$0xff]
    %v159 = vld [vmem:[#allocation5 + $0x2a8] sm:$0xff]
    %v160 = vld [vmem:[#allocation5 + $0x2b0] sm:$0xff]
    %v161 = vld [vmem:[#allocation5 + $0x2b8] sm:$0xff]
    %v162 = vld [vmem:[#allocation5 + $0x2c0] sm:$0xff]
    %v163 = vld [vmem:[#allocation5 + $0x2c8] sm:$0xff]
    %v164 = vld [vmem:[#allocation5 + $0x2d0] sm:$0xff]
    %v165 = vld [vmem:[#allocation5 + $0x2d8] sm:$0xff]
    %v166 = vld [vmem:[#allocation5 + $0x2e0] sm:$0xff]
    %v167 = vld [vmem:[#allocation5 + $0x2e8] sm:$0xff]
    %v168 = vld [vmem:[#allocation5 + $0x2f0] sm:$0xff]
    %v169 = vld [vmem:[#allocation5 + $0x2f8] sm:$0xff]
    %v170 = vld [vmem:[#allocation5 + $0x300] sm:$0xff]
    %v171 = vld [vmem:[#allocation5 + $0x308] sm:$0xff]
    %v172 = vld [vmem:[#allocation5 + $0x310] sm:$0xff]
    %v173 = vld [vmem:[#allocation5 + $0x318] sm:$0xff]
    %v174 = vld [vmem:[#allocation5 + $0x320] sm:$0xff]
    %v175 = vld [vmem:[#allocation5 + $0x328] sm:$0xff]
    %v176 = vld [vmem:[#allocation5 + $0x330] sm:$0xff]
    %v177 = vld [vmem:[#allocation5 + $0x338] sm:$0xff]
    %v178 = vld [vmem:[#allocation5 + $0x340] sm:$0xff]
    %v179 = vld [vmem:[#allocation5 + $0x348] sm:$0xff]
    %v180 = vld [vmem:[#allocation5 + $0x350] sm:$0xff]
    %v181 = vld [vmem:[#allocation5 + $0x358] sm:$0xff]
    %v182 = vld [vmem:[#allocation5 + $0x360] sm:$0xff]
    %v183 = vld [vmem:[#allocation5 + $0x368] sm:$0xff]
    %v184 = vld [vmem:[#allocation5 + $0x370] sm:$0xff]
    %v185 = vld [vmem:[#allocation5 + $0x378] sm:$0xff]
    %v186 = vld [vmem:[#allocation5 + $0x380] sm:$0xff]
    %v187 = vld [vmem:[#allocation5 + $0x388] sm:$0xff]
    %v188 = vld [vmem:[#allocation5 + $0x390] sm:$0xff]
    %v189 = vld [vmem:[#allocation5 + $0x398] sm:$0xff]
    %v190 = vld [vmem:[#allocation5 + $0x3a0] sm:$0xff]
    %v191 = vld [vmem:[#allocation5 + $0x3a8] sm:$0xff]
    %v192 = vld [vmem:[#allocation5 + $0x3b0] sm:$0xff]
    %v193 = vld [vmem:[#allocation5 + $0x3b8] sm:$0xff]
    %v194 = vld [vmem:[#allocation5 + $0x3c0] sm:$0xff]
    %v195 = vld [vmem:[#allocation5 + $0x3c8] sm:$0xff]
    %v196 = vld [vmem:[#allocation5 + $0x3d0] sm:$0xff]
    %v197 = vld [vmem:[#allocation5 + $0x3d8] sm:$0xff]
    %v198 = vld [vmem:[#allocation5 + $0x3e0] sm:$0xff]
    %v199 = vld [vmem:[#allocation5 + $0x3e8] sm:$0xff]
    %v200 = vld [vmem:[#allocation5 + $0x3f0] sm:$0xff]
    %v201 = vld [vmem:[#allocation5 + $0x3f8] sm:$0xff]
    %v202 = vld [vmem:[#allocation7] sm:$0x3]
    %v204 = vperm.slane %v202, 0
    %v205 = vperm.slane %v202, 1
    %v336 = vunpack.c.l.b16 %v74
    %v337 = vunpack.c.h.b16 %v74
    %v338 = vunpack.c.l.b16 %v75
    %v339 = vunpack.c.h.b16 %v75
    %v340 = vunpack.c.l.b16 %v76
    %v341 = vunpack.c.h.b16 %v76
    %v342 = vunpack.c.l.b16 %v77
    %v343 = vunpack.c.h.b16 %v77
    %v344 = vunpack.c.l.b16 %v78
    %v345 = vunpack.c.h.b16 %v78
    %v346 = vunpack.c.l.b16 %v79
    %v347 = vunpack.c.h.b16 %v79
    %v348 = vunpack.c.l.b16 %v80
    %v349 = vunpack.c.h.b16 %v80
    %v350 = vunpack.c.l.b16 %v81
    %v351 = vunpack.c.h.b16 %v81
    %v352 = vunpack.c.l.b16 %v82
    %v353 = vunpack.c.h.b16 %v82
    %v354 = vunpack.c.l.b16 %v83
    %v355 = vunpack.c.h.b16 %v83
    %v356 = vunpack.c.l.b16 %v84
    %v357 = vunpack.c.h.b16 %v84
    %v358 = vunpack.c.l.b16 %v85
    %v359 = vunpack.c.h.b16 %v85
    %v360 = vunpack.c.l.b16 %v86
    %v361 = vunpack.c.h.b16 %v86
    %v362 = vunpack.c.l.b16 %v87
    %v363 = vunpack.c.h.b16 %v87
    %v364 = vunpack.c.l.b16 %v88
    %v365 = vunpack.c.h.b16 %v88
    %v366 = vunpack.c.l.b16 %v89
    %v367 = vunpack.c.h.b16 %v89
    %v368 = vunpack.c.l.b16 %v90
    %v369 = vunpack.c.h.b16 %v90
    %v370 = vunpack.c.l.b16 %v91
    %v371 = vunpack.c.h.b16 %v91
    %v372 = vunpack.c.l.b16 %v92
    %v373 = vunpack.c.h.b16 %v92
    %v374 = vunpack.c.l.b16 %v93
    %v375 = vunpack.c.h.b16 %v93
    %v376 = vunpack.c.l.b16 %v94
    %v377 = vunpack.c.h.b16 %v94
    %v378 = vunpack.c.l.b16 %v95
    %v379 = vunpack.c.h.b16 %v95
    %v380 = vunpack.c.l.b16 %v96
    %v381 = vunpack.c.h.b16 %v96
    %v382 = vunpack.c.l.b16 %v97
    %v383 = vunpack.c.h.b16 %v97
    %v384 = vunpack.c.l.b16 %v98
    %v385 = vunpack.c.h.b16 %v98
    %v386 = vunpack.c.l.b16 %v99
    %v387 = vunpack.c.h.b16 %v99
    %v388 = vunpack.c.l.b16 %v100
    %v389 = vunpack.c.h.b16 %v100
    %v390 = vunpack.c.l.b16 %v101
    %v391 = vunpack.c.h.b16 %v101
    %v392 = vunpack.c.l.b16 %v102
    %v393 = vunpack.c.h.b16 %v102
    %v394 = vunpack.c.l.b16 %v103
    %v395 = vunpack.c.h.b16 %v103
    %v396 = vunpack.c.l.b16 %v104
    %v397 = vunpack.c.h.b16 %v104
    %v398 = vunpack.c.l.b16 %v105
    %v399 = vunpack.c.h.b16 %v105
    %v400 = vunpack.c.l.b16 %v106
    %v401 = vunpack.c.h.b16 %v106
    %v402 = vunpack.c.l.b16 %v107
    %v403 = vunpack.c.h.b16 %v107
    %v404 = vunpack.c.l.b16 %v108
    %v405 = vunpack.c.h.b16 %v108
    %v406 = vunpack.c.l.b16 %v109
    %v407 = vunpack.c.h.b16 %v109
    %v408 = vunpack.c.l.b16 %v110
    %v409 = vunpack.c.h.b16 %v110
    %v410 = vunpack.c.l.b16 %v111
    %v411 = vunpack.c.h.b16 %v111
    %v412 = vunpack.c.l.b16 %v112
    %v413 = vunpack.c.h.b16 %v112
    %v414 = vunpack.c.l.b16 %v113
    %v415 = vunpack.c.h.b16 %v113
    %v416 = vunpack.c.l.b16 %v114
    %v417 = vunpack.c.h.b16 %v114
    %v418 = vunpack.c.l.b16 %v115
    %v419 = vunpack.c.h.b16 %v115
    %v420 = vunpack.c.l.b16 %v116
    %v421 = vunpack.c.h.b16 %v116
    %v422 = vunpack.c.l.b16 %v117
    %v423 = vunpack.c.h.b16 %v117
    %v424 = vunpack.c.l.b16 %v118
    %v425 = vunpack.c.h.b16 %v118
    %v426 = vunpack.c.l.b16 %v119
    %v427 = vunpack.c.h.b16 %v119
    %v428 = vunpack.c.l.b16 %v120
    %v429 = vunpack.c.h.b16 %v120
    %v430 = vunpack.c.l.b16 %v121
    %v431 = vunpack.c.h.b16 %v121
    %v432 = vunpack.c.l.b16 %v122
    %v433 = vunpack.c.h.b16 %v122
    %v434 = vunpack.c.l.b16 %v123
    %v435 = vunpack.c.h.b16 %v123
    %v436 = vunpack.c.l.b16 %v124
    %v437 = vunpack.c.h.b16 %v124
    %v438 = vunpack.c.l.b16 %v125
    %v439 = vunpack.c.h.b16 %v125
    %v440 = vunpack.c.l.b16 %v126
    %v441 = vunpack.c.h.b16 %v126
    %v442 = vunpack.c.l.b16 %v127
    %v443 = vunpack.c.h.b16 %v127
    %v444 = vunpack.c.l.b16 %v128
    %v445 = vunpack.c.h.b16 %v128
    %v446 = vunpack.c.l.b16 %v129
    %v447 = vunpack.c.h.b16 %v129
    %v448 = vunpack.c.l.b16 %v130
    %v449 = vunpack.c.h.b16 %v130
    %v450 = vunpack.c.l.b16 %v131
    %v451 = vunpack.c.h.b16 %v131
    %v452 = vunpack.c.l.b16 %v132
    %v453 = vunpack.c.h.b16 %v132
    %v454 = vunpack.c.l.b16 %v133
    %v455 = vunpack.c.h.b16 %v133
    %v456 = vunpack.c.l.b16 %v134
    %v457 = vunpack.c.h.b16 %v134
    %v458 = vunpack.c.l.b16 %v135
    %v459 = vunpack.c.h.b16 %v135
    %v460 = vunpack.c.l.b16 %v136
    %v461 = vunpack.c.h.b16 %v136
    %v462 = vunpack.c.l.b16 %v137
    %v463 = vunpack.c.h.b16 %v137
    %v464 = vunpack.c.l.b16 %v138
    %v465 = vunpack.c.h.b16 %v138
    %v466 = vunpack.c.l.b16 %v139
    %v467 = vunpack.c.h.b16 %v139
    %v468 = vunpack.c.l.b16 %v140
    %v469 = vunpack.c.h.b16 %v140
    %v470 = vunpack.c.l.b16 %v141
    %v471 = vunpack.c.h.b16 %v141
    %v472 = vunpack.c.l.b16 %v142
    %v473 = vunpack.c.h.b16 %v142
    %v474 = vunpack.c.l.b16 %v143
    %v475 = vunpack.c.h.b16 %v143
    %v476 = vunpack.c.l.b16 %v144
    %v477 = vunpack.c.h.b16 %v144
    %v478 = vunpack.c.l.b16 %v145
    %v479 = vunpack.c.h.b16 %v145
    %v480 = vunpack.c.l.b16 %v146
    %v481 = vunpack.c.h.b16 %v146
    %v482 = vunpack.c.l.b16 %v147
    %v483 = vunpack.c.h.b16 %v147
    %v484 = vunpack.c.l.b16 %v148
    %v485 = vunpack.c.h.b16 %v148
    %v486 = vunpack.c.l.b16 %v149
    %v487 = vunpack.c.h.b16 %v149
    %v488 = vunpack.c.l.b16 %v150
    %v489 = vunpack.c.h.b16 %v150
    %v490 = vunpack.c.l.b16 %v151
    %v491 = vunpack.c.h.b16 %v151
    %v492 = vunpack.c.l.b16 %v152
    %v493 = vunpack.c.h.b16 %v152
    %v494 = vunpack.c.l.b16 %v153
    %v495 = vunpack.c.h.b16 %v153
    %v496 = vunpack.c.l.b16 %v154
    %v497 = vunpack.c.h.b16 %v154
    %v498 = vunpack.c.l.b16 %v155
    %v499 = vunpack.c.h.b16 %v155
    %v500 = vunpack.c.l.b16 %v156
    %v501 = vunpack.c.h.b16 %v156
    %v502 = vunpack.c.l.b16 %v157
    %v503 = vunpack.c.h.b16 %v157
    %v504 = vunpack.c.l.b16 %v158
    %v505 = vunpack.c.h.b16 %v158
    %v506 = vunpack.c.l.b16 %v159
    %v507 = vunpack.c.h.b16 %v159
    %v508 = vunpack.c.l.b16 %v160
    %v509 = vunpack.c.h.b16 %v160
    %v510 = vunpack.c.l.b16 %v161
    %v511 = vunpack.c.h.b16 %v161
    %v512 = vunpack.c.l.b16 %v162
    %v513 = vunpack.c.h.b16 %v162
    %v514 = vunpack.c.l.b16 %v163
    %v515 = vunpack.c.h.b16 %v163
    %v516 = vunpack.c.l.b16 %v164
    %v517 = vunpack.c.h.b16 %v164
    %v518 = vunpack.c.l.b16 %v165
    %v519 = vunpack.c.h.b16 %v165
    %v520 = vunpack.c.l.b16 %v166
    %v521 = vunpack.c.h.b16 %v166
    %v522 = vunpack.c.l.b16 %v167
    %v523 = vunpack.c.h.b16 %v167
    %v524 = vunpack.c.l.b16 %v168
    %v525 = vunpack.c.h.b16 %v168
    %v526 = vunpack.c.l.b16 %v169
    %v527 = vunpack.c.h.b16 %v169
    %v528 = vunpack.c.l.b16 %v170
    %v529 = vunpack.c.h.b16 %v170
    %v530 = vunpack.c.l.b16 %v171
    %v531 = vunpack.c.h.b16 %v171
    %v532 = vunpack.c.l.b16 %v172
    %v533 = vunpack.c.h.b16 %v172
    %v534 = vunpack.c.l.b16 %v173
    %v535 = vunpack.c.h.b16 %v173
    %v536 = vunpack.c.l.b16 %v174
    %v537 = vunpack.c.h.b16 %v174
    %v538 = vunpack.c.l.b16 %v175
    %v539 = vunpack.c.h.b16 %v175
    %v540 = vunpack.c.l.b16 %v176
    %v541 = vunpack.c.h.b16 %v176
    %v542 = vunpack.c.l.b16 %v177
    %v543 = vunpack.c.h.b16 %v177
    %v544 = vunpack.c.l.b16 %v178
    %v545 = vunpack.c.h.b16 %v178
    %v546 = vunpack.c.l.b16 %v179
    %v547 = vunpack.c.h.b16 %v179
    %v548 = vunpack.c.l.b16 %v180
    %v549 = vunpack.c.h.b16 %v180
    %v550 = vunpack.c.l.b16 %v181
    %v551 = vunpack.c.h.b16 %v181
    %v552 = vunpack.c.l.b16 %v182
    %v553 = vunpack.c.h.b16 %v182
    %v554 = vunpack.c.l.b16 %v183
    %v555 = vunpack.c.h.b16 %v183
    %v556 = vunpack.c.l.b16 %v184
    %v557 = vunpack.c.h.b16 %v184
    %v558 = vunpack.c.l.b16 %v185
    %v559 = vunpack.c.h.b16 %v185
    %v560 = vunpack.c.l.b16 %v186
    %v561 = vunpack.c.h.b16 %v186
    %v562 = vunpack.c.l.b16 %v187
    %v563 = vunpack.c.h.b16 %v187
    %v564 = vunpack.c.l.b16 %v188
    %v565 = vunpack.c.h.b16 %v188
    %v566 = vunpack.c.l.b16 %v189
    %v567 = vunpack.c.h.b16 %v189
    %v568 = vunpack.c.l.b16 %v190
    %v569 = vunpack.c.h.b16 %v190
    %v570 = vunpack.c.l.b16 %v191
    %v571 = vunpack.c.h.b16 %v191
    %v572 = vunpack.c.l.b16 %v192
    %v573 = vunpack.c.h.b16 %v192
    %v574 = vunpack.c.l.b16 %v193
    %v575 = vunpack.c.h.b16 %v193
    %v576 = vunpack.c.l.b16 %v194
    %v577 = vunpack.c.h.b16 %v194
    %v578 = vunpack.c.l.b16 %v195
    %v579 = vunpack.c.h.b16 %v195
    %v580 = vunpack.c.l.b16 %v196
    %v581 = vunpack.c.h.b16 %v196
    %v582 = vunpack.c.l.b16 %v197
    %v583 = vunpack.c.h.b16 %v197
    %v584 = vunpack.c.l.b16 %v198
    %v585 = vunpack.c.h.b16 %v198
    %v586 = vunpack.c.l.b16 %v199
    %v587 = vunpack.c.h.b16 %v199
    %v588 = vunpack.c.l.b16 %v200
    %v589 = vunpack.c.h.b16 %v200
    %v590 = vunpack.c.l.b16 %v201
    %v591 = vunpack.c.h.b16 %v201
    %v592 = vpack.c.b16 %v338, %v336
    %v593 = vpack.c.b16 %v339, %v337
    %v594 = vpack.c.b16 %v342, %v340
    %v595 = vpack.c.b16 %v343, %v341
    %v596 = vpack.c.b16 %v346, %v344
    %v597 = vpack.c.b16 %v347, %v345
    %v598 = vpack.c.b16 %v350, %v348
    %v599 = vpack.c.b16 %v351, %v349
    %v600 = vpack.c.b16 %v354, %v352
    %v601 = vpack.c.b16 %v355, %v353
    %v602 = vpack.c.b16 %v358, %v356
    %v603 = vpack.c.b16 %v359, %v357
    %v604 = vpack.c.b16 %v362, %v360
    %v605 = vpack.c.b16 %v363, %v361
    %v606 = vpack.c.b16 %v366, %v364
    %v607 = vpack.c.b16 %v367, %v365
    %v608 = vpack.c.b16 %v370, %v368
    %v609 = vpack.c.b16 %v371, %v369
    %v610 = vpack.c.b16 %v374, %v372
    %v611 = vpack.c.b16 %v375, %v373
    %v612 = vpack.c.b16 %v378, %v376
    %v613 = vpack.c.b16 %v379, %v377
    %v614 = vpack.c.b16 %v382, %v380
    %v615 = vpack.c.b16 %v383, %v381
    %v616 = vpack.c.b16 %v386, %v384
    %v617 = vpack.c.b16 %v387, %v385
    %v618 = vpack.c.b16 %v390, %v388
    %v619 = vpack.c.b16 %v391, %v389
    %v620 = vpack.c.b16 %v394, %v392
    %v621 = vpack.c.b16 %v395, %v393
    %v622 = vpack.c.b16 %v398, %v396
    %v623 = vpack.c.b16 %v399, %v397
    %v624 = vpack.c.b16 %v402, %v400
    %v625 = vpack.c.b16 %v403, %v401
    %v626 = vpack.c.b16 %v406, %v404
    %v627 = vpack.c.b16 %v407, %v405
    %v628 = vpack.c.b16 %v410, %v408
    %v629 = vpack.c.b16 %v411, %v409
    %v630 = vpack.c.b16 %v414, %v412
    %v631 = vpack.c.b16 %v415, %v413
    %v632 = vpack.c.b16 %v418, %v416
    %v633 = vpack.c.b16 %v419, %v417
    %v634 = vpack.c.b16 %v422, %v420
    %v635 = vpack.c.b16 %v423, %v421
    %v636 = vpack.c.b16 %v426, %v424
    %v637 = vpack.c.b16 %v427, %v425
    %v638 = vpack.c.b16 %v430, %v428
    %v639 = vpack.c.b16 %v431, %v429
    %v640 = vpack.c.b16 %v434, %v432
    %v641 = vpack.c.b16 %v435, %v433
    %v642 = vpack.c.b16 %v438, %v436
    %v643 = vpack.c.b16 %v439, %v437
    %v644 = vpack.c.b16 %v442, %v440
    %v645 = vpack.c.b16 %v443, %v441
    %v646 = vpack.c.b16 %v446, %v444
    %v647 = vpack.c.b16 %v447, %v445
    %v648 = vpack.c.b16 %v450, %v448
    %v649 = vpack.c.b16 %v451, %v449
    %v650 = vpack.c.b16 %v454, %v452
    %v651 = vpack.c.b16 %v455, %v453
    %v652 = vpack.c.b16 %v458, %v456
    %v653 = vpack.c.b16 %v459, %v457
    %v654 = vpack.c.b16 %v462, %v460
    %v655 = vpack.c.b16 %v463, %v461
    %v656 = vpack.c.b16 %v466, %v464
    %v657 = vpack.c.b16 %v467, %v465
    %v658 = vpack.c.b16 %v470, %v468
    %v659 = vpack.c.b16 %v471, %v469
    %v660 = vpack.c.b16 %v474, %v472
    %v661 = vpack.c.b16 %v475, %v473
    %v662 = vpack.c.b16 %v478, %v476
    %v663 = vpack.c.b16 %v479, %v477
    %v664 = vpack.c.b16 %v482, %v480
    %v665 = vpack.c.b16 %v483, %v481
    %v666 = vpack.c.b16 %v486, %v484
    %v667 = vpack.c.b16 %v487, %v485
    %v668 = vpack.c.b16 %v490, %v488
    %v669 = vpack.c.b16 %v491, %v489
    %v670 = vpack.c.b16 %v494, %v492
    %v671 = vpack.c.b16 %v495, %v493
    %v672 = vpack.c.b16 %v498, %v496
    %v673 = vpack.c.b16 %v499, %v497
    %v674 = vpack.c.b16 %v502, %v500
    %v675 = vpack.c.b16 %v503, %v501
    %v676 = vpack.c.b16 %v506, %v504
    %v677 = vpack.c.b16 %v507, %v505
    %v678 = vpack.c.b16 %v510, %v508
    %v679 = vpack.c.b16 %v511, %v509
    %v680 = vpack.c.b16 %v514, %v512
    %v681 = vpack.c.b16 %v515, %v513
    %v682 = vpack.c.b16 %v518, %v516
    %v683 = vpack.c.b16 %v519, %v517
    %v684 = vpack.c.b16 %v522, %v520
    %v685 = vpack.c.b16 %v523, %v521
    %v686 = vpack.c.b16 %v526, %v524
    %v687 = vpack.c.b16 %v527, %v525
    %v688 = vpack.c.b16 %v530, %v528
    %v689 = vpack.c.b16 %v531, %v529
    %v690 = vpack.c.b16 %v534, %v532
    %v691 = vpack.c.b16 %v535, %v533
    %v692 = vpack.c.b16 %v538, %v536
    %v693 = vpack.c.b16 %v539, %v537
    %v694 = vpack.c.b16 %v542, %v540
    %v695 = vpack.c.b16 %v543, %v541
    %v696 = vpack.c.b16 %v546, %v544
    %v697 = vpack.c.b16 %v547, %v545
    %v698 = vpack.c.b16 %v550, %v548
    %v699 = vpack.c.b16 %v551, %v549
    %v700 = vpack.c.b16 %v554, %v552
    %v701 = vpack.c.b16 %v555, %v553
    %v702 = vpack.c.b16 %v558, %v556
    %v703 = vpack.c.b16 %v559, %v557
    %v704 = vpack.c.b16 %v562, %v560
    %v705 = vpack.c.b16 %v563, %v561
    %v706 = vpack.c.b16 %v566, %v564
    %v707 = vpack.c.b16 %v567, %v565
    %v708 = vpack.c.b16 %v570, %v568
    %v709 = vpack.c.b16 %v571, %v569
    %v710 = vpack.c.b16 %v574, %v572
    %v711 = vpack.c.b16 %v575, %v573
    %v712 = vpack.c.b16 %v578, %v576
    %v713 = vpack.c.b16 %v579, %v577
    %v714 = vpack.c.b16 %v582, %v580
    %v715 = vpack.c.b16 %v583, %v581
    %v716 = vpack.c.b16 %v586, %v584
    %v717 = vpack.c.b16 %v587, %v585
    %v718 = vpack.c.b16 %v590, %v588
    %v719 = vpack.c.b16 %v591, %v589
    %848 = vmatpush.bf16.msra.mxu0 %v606
    %849 = vmatpush.bf16.msra.mxu0 %v604
    %850 = vmatpush.bf16.msra.mxu0 %v602
    %851 = vmatpush.bf16.msra.mxu0 %v600
    %852 = vmatpush.bf16.msra.mxu0 %v598
    %853 = vmatpush.bf16.msra.mxu0 %v596
    %854 = vmatpush.bf16.msra.mxu0 %v594
    %855 = vmatpush.bf16.msra.mxu0 %v592
    %856 = vmatmul.bf16.gmra.mxu0 %v66
    %v857 = vpop.f32.mrf.mxu0
    %v858 = vadd.f32 %v204, %v857
    %v859 = vpop.f32.mrf.mxu0
    %860 = vdwg.mxu0
    %861 = vmatpush.bf16.msra.mxu0 %v622
    %862 = vmatpush.bf16.msra.mxu0 %v620
    %863 = vmatpush.bf16.msra.mxu0 %v618
    %864 = vmatpush.bf16.msra.mxu0 %v616
    %865 = vmatpush.bf16.msra.mxu0 %v614
    %866 = vmatpush.bf16.msra.mxu0 %v612
    %867 = vmatpush.bf16.msra.mxu0 %v610
    %868 = vmatpush.bf16.msra.mxu0 %v608
    %869 = vmatmul.bf16.gmra.mxu0 %v67
    %v870 = vpop.f32.mrf.mxu0
    %v871 = vadd.f32 %v858, %v870
    %v872 = vpop.f32.mrf.mxu0
    %873 = vdwg.mxu0
    %874 = vmatpush.bf16.msra.mxu0 %v638
    %875 = vmatpush.bf16.msra.mxu0 %v636
    %876 = vmatpush.bf16.msra.mxu0 %v634
    %877 = vmatpush.bf16.msra.mxu0 %v632
    %878 = vmatpush.bf16.msra.mxu0 %v630
    %879 = vmatpush.bf16.msra.mxu0 %v628
    %880 = vmatpush.bf16.msra.mxu0 %v626
    %881 = vmatpush.bf16.msra.mxu0 %v624
    %882 = vmatmul.bf16.gmra.mxu0 %v68
    %v883 = vpop.f32.mrf.mxu0
    %v884 = vadd.f32 %v871, %v883
    %v885 = vpop.f32.mrf.mxu0
    %886 = vdwg.mxu0
    %887 = vmatpush.bf16.msra.mxu0 %v654
    %888 = vmatpush.bf16.msra.mxu0 %v652
    %889 = vmatpush.bf16.msra.mxu0 %v650
    %890 = vmatpush.bf16.msra.mxu0 %v648
    %891 = vmatpush.bf16.msra.mxu0 %v646
    %892 = vmatpush.bf16.msra.mxu0 %v644
    %893 = vmatpush.bf16.msra.mxu0 %v642
    %894 = vmatpush.bf16.msra.mxu0 %v640
    %895 = vmatmul.bf16.gmra.mxu0 %v69
    %v896 = vpop.f32.mrf.mxu0
    %v897 = vadd.f32 %v884, %v896
    %v898 = vpop.f32.mrf.mxu0
    %899 = vdwg.mxu0
    %900 = vmatpush.bf16.msra.mxu0 %v670
    %901 = vmatpush.bf16.msra.mxu0 %v668
    %902 = vmatpush.bf16.msra.mxu0 %v666
    %903 = vmatpush.bf16.msra.mxu0 %v664
    %904 = vmatpush.bf16.msra.mxu0 %v662
    %905 = vmatpush.bf16.msra.mxu0 %v660
    %906 = vmatpush.bf16.msra.mxu0 %v658
    %907 = vmatpush.bf16.msra.mxu0 %v656
    %908 = vmatmul.bf16.gmra.mxu0 %v70
    %v909 = vpop.f32.mrf.mxu0
    %v910 = vadd.f32 %v897, %v909
    %v911 = vpop.f32.mrf.mxu0
    %912 = vdwg.mxu0
    %913 = vmatpush.bf16.msra.mxu0 %v686
    %914 = vmatpush.bf16.msra.mxu0 %v684
    %915 = vmatpush.bf16.msra.mxu0 %v682
    %916 = vmatpush.bf16.msra.mxu0 %v680
    %917 = vmatpush.bf16.msra.mxu0 %v678
    %918 = vmatpush.bf16.msra.mxu0 %v676
    %919 = vmatpush.bf16.msra.mxu0 %v674
    %920 = vmatpush.bf16.msra.mxu0 %v672
    %921 = vmatmul.bf16.gmra.mxu0 %v71
    %v922 = vpop.f32.mrf.mxu0
    %v923 = vadd.f32 %v910, %v922
    %v924 = vpop.f32.mrf.mxu0
    %925 = vdwg.mxu0
    %926 = vmatpush.bf16.msra.mxu0 %v702
    %927 = vmatpush.bf16.msra.mxu0 %v700
    %928 = vmatpush.bf16.msra.mxu0 %v698
    %929 = vmatpush.bf16.msra.mxu0 %v696
    %930 = vmatpush.bf16.msra.mxu0 %v694
    %931 = vmatpush.bf16.msra.mxu0 %v692
    %932 = vmatpush.bf16.msra.mxu0 %v690
    %933 = vmatpush.bf16.msra.mxu0 %v688
    %934 = vmatmul.bf16.gmra.mxu0 %v72
    %v935 = vpop.f32.mrf.mxu0
    %v936 = vadd.f32 %v923, %v935
    %v937 = vpop.f32.mrf.mxu0
    %938 = vdwg.mxu0
    %939 = vmatpush.bf16.msra.mxu0 %v718
    %940 = vmatpush.bf16.msra.mxu0 %v716
    %941 = vmatpush.bf16.msra.mxu0 %v714
    %942 = vmatpush.bf16.msra.mxu0 %v712
    %943 = vmatpush.bf16.msra.mxu0 %v710
    %944 = vmatpush.bf16.msra.mxu0 %v708
    %945 = vmatpush.bf16.msra.mxu0 %v706
    %946 = vmatpush.bf16.msra.mxu0 %v704
    %947 = vmatmul.bf16.gmra.mxu0 %v73
    %v948 = vpop.f32.mrf.mxu0
    %v949 = vadd.f32 %v936, %v948
    %v950 = vpop.f32.mrf.mxu0
    %951 = vdwg.mxu0
    %952 = vmatpush.bf16.msra.mxu0 %v607
    %953 = vmatpush.bf16.msra.mxu0 %v605
    %954 = vmatpush.bf16.msra.mxu0 %v603
    %955 = vmatpush.bf16.msra.mxu0 %v601
    %956 = vmatpush.bf16.msra.mxu0 %v599
    %957 = vmatpush.bf16.msra.mxu0 %v597
    %958 = vmatpush.bf16.msra.mxu0 %v595
    %959 = vmatpush.bf16.msra.mxu0 %v593
    %960 = vmatmul.bf16.gmra.mxu0 %v66
    %v961 = vpop.f32.mrf.mxu0
    %v962 = vadd.f32 %v205, %v961
    %v963 = vpop.f32.mrf.mxu0
    %964 = vdwg.mxu0
    %965 = vmatpush.bf16.msra.mxu0 %v623
    %966 = vmatpush.bf16.msra.mxu0 %v621
    %967 = vmatpush.bf16.msra.mxu0 %v619
    %968 = vmatpush.bf16.msra.mxu0 %v617
    %969 = vmatpush.bf16.msra.mxu0 %v615
    %970 = vmatpush.bf16.msra.mxu0 %v613
    %971 = vmatpush.bf16.msra.mxu0 %v611
    %972 = vmatpush.bf16.msra.mxu0 %v609
    %973 = vmatmul.bf16.gmra.mxu0 %v67
    %v974 = vpop.f32.mrf.mxu0
    %v975 = vadd.f32 %v962, %v974
    %v976 = vpop.f32.mrf.mxu0
    %977 = vdwg.mxu0
    %978 = vmatpush.bf16.msra.mxu0 %v639
    %979 = vmatpush.bf16.msra.mxu0 %v637
    %980 = vmatpush.bf16.msra.mxu0 %v635
    %981 = vmatpush.bf16.msra.mxu0 %v633
    %982 = vmatpush.bf16.msra.mxu0 %v631
    %983 = vmatpush.bf16.msra.mxu0 %v629
    %984 = vmatpush.bf16.msra.mxu0 %v627
    %985 = vmatpush.bf16.msra.mxu0 %v625
    %986 = vmatmul.bf16.gmra.mxu0 %v68
    %v987 = vpop.f32.mrf.mxu0
    %v988 = vadd.f32 %v975, %v987
    %v989 = vpop.f32.mrf.mxu0
    %990 = vdwg.mxu0
    %991 = vmatpush.bf16.msra.mxu0 %v655
    %992 = vmatpush.bf16.msra.mxu0 %v653
    %993 = vmatpush.bf16.msra.mxu0 %v651
    %994 = vmatpush.bf16.msra.mxu0 %v649
    %995 = vmatpush.bf16.msra.mxu0 %v647
    %996 = vmatpush.bf16.msra.mxu0 %v645
    %997 = vmatpush.bf16.msra.mxu0 %v643
    %998 = vmatpush.bf16.msra.mxu0 %v641
    %999 = vmatmul.bf16.gmra.mxu0 %v69
    %v1000 = vpop.f32.mrf.mxu0
    %v1001 = vadd.f32 %v988, %v1000
    %v1002 = vpop.f32.mrf.mxu0
    %1003 = vdwg.mxu0
    %1004 = vmatpush.bf16.msra.mxu0 %v671
    %1005 = vmatpush.bf16.msra.mxu0 %v669
    %1006 = vmatpush.bf16.msra.mxu0 %v667
    %1007 = vmatpush.bf16.msra.mxu0 %v665
    %1008 = vmatpush.bf16.msra.mxu0 %v663
    %1009 = vmatpush.bf16.msra.mxu0 %v661
    %1010 = vmatpush.bf16.msra.mxu0 %v659
    %1011 = vmatpush.bf16.msra.mxu0 %v657
    %1012 = vmatmul.bf16.gmra.mxu0 %v70
    %v1013 = vpop.f32.mrf.mxu0
    %v1014 = vadd.f32 %v1001, %v1013
    %v1015 = vpop.f32.mrf.mxu0
    %1016 = vdwg.mxu0
    %1017 = vmatpush.bf16.msra.mxu0 %v687
    %1018 = vmatpush.bf16.msra.mxu0 %v685
    %1019 = vmatpush.bf16.msra.mxu0 %v683
    %1020 = vmatpush.bf16.msra.mxu0 %v681
    %1021 = vmatpush.bf16.msra.mxu0 %v679
    %1022 = vmatpush.bf16.msra.mxu0 %v677
    %1023 = vmatpush.bf16.msra.mxu0 %v675
    %1024 = vmatpush.bf16.msra.mxu0 %v673
    %1025 = vmatmul.bf16.gmra.mxu0 %v71
    %v1026 = vpop.f32.mrf.mxu0
    %v1027 = vadd.f32 %v1014, %v1026
    %v1028 = vpop.f32.mrf.mxu0
    %1029 = vdwg.mxu0
    %1030 = vmatpush.bf16.msra.mxu0 %v703
    %1031 = vmatpush.bf16.msra.mxu0 %v701
    %1032 = vmatpush.bf16.msra.mxu0 %v699
    %1033 = vmatpush.bf16.msra.mxu0 %v697
    %1034 = vmatpush.bf16.msra.mxu0 %v695
    %1035 = vmatpush.bf16.msra.mxu0 %v693
    %1036 = vmatpush.bf16.msra.mxu0 %v691
    %1037 = vmatpush.bf16.msra.mxu0 %v689
    %1038 = vmatmul.bf16.gmra.mxu0 %v72
    %v1039 = vpop.f32.mrf.mxu0
    %v1040 = vadd.f32 %v1027, %v1039
    %v1041 = vpop.f32.mrf.mxu0
    %1042 = vdwg.mxu0
    %1043 = vmatpush.bf16.msra.mxu0 %v719
    %1044 = vmatpush.bf16.msra.mxu0 %v717
    %1045 = vmatpush.bf16.msra.mxu0 %v715
    %1046 = vmatpush.bf16.msra.mxu0 %v713
    %1047 = vmatpush.bf16.msra.mxu0 %v711
    %1048 = vmatpush.bf16.msra.mxu0 %v709
    %1049 = vmatpush.bf16.msra.mxu0 %v707
    %1050 = vmatpush.bf16.msra.mxu0 %v705
    %1051 = vmatmul.bf16.gmra.mxu0 %v73
    %v1052 = vpop.f32.mrf.mxu0
    %v1053 = vadd.f32 %v1040, %v1052
    %v1054 = vpop.f32.mrf.mxu0
    %1055 = vdwg.mxu0
    %v1056 = vmax.f32 %v949, 0.0
    %v1057 = vmax.f32 %v1053, 0.0
    %v1058 = vpack.c.bf16 %v1057, %v1056
    %1059 = vst [vmem:[#allocation8] sm:$0xff] %v1058
    // Predicated region
    $region26: #{tpu_custom_call.1} parent=1 // pred_check
      _
    $region27: #{tpu_custom_call.1} parent=1 // pred_check_branch
      %1061 = sbr.rel (0) target = $region29
    $region28: #{tpu_custom_call.1} parent=1 // pred_region
      %1063 = vsyncadd [#allocation4], 0
      %s1065 = sshll.u32 [#allocation8], 4
      %s1066 = int_to_ptr.vmem [resolvable:$true] %s1065
      %s1067 = sshll.u32 %s3, 4
      %s1068 = int_to_ptr.hbm [resolvable:$true] %s1067
      %1070 = dma.vmem_to_hbm [thread:$0]  %s1066, 128, %s1068, [#allocation4]
    $region29: #{tpu_custom_call.1} parent=1 // pred_fallthru
      _
    // Predicated region
    $region30: #{tpu_custom_call.1} parent=1 // pred_check
      _
    $region31: #{tpu_custom_call.1} parent=1 // pred_check_branch
      %1072 = sbr.rel (0) target = $region33
    $region32: #{tpu_custom_call.1} parent=1 // pred_region
      %1074 = dma.done [#allocation4], 128
    $region33: #{tpu_custom_call.1} parent=1 // pred_fallthru
      _
    %1075 = vsyncpa [#allocation3], 1
    %1076 = vsyncpa [#allocation6], 1
    %1077 = vsyncpa [#allocation4], 1

</llo_original>
